<compile_context>
chip_gen: v6e
topology: v6e:2x2x1
jax: 0.10.0
libtpu: 0.0.40
codegen_flags: <defaults>
</compile_context>

<pallas_src>
import functools

import jax
import jax.numpy as jnp
from jax.experimental import pallas as pl
from jax.experimental.pallas import tpu as pltpu

_MAX_TILE_ROWS = 256          # 256 * 128 boxes / tile -> 1 MiB input tile (f32)
_LANES = 128


def _iou_loss_kernel(n_ref, boxes_ref, out_ref, *, loss_type, reduction, tile_elems):
    # boxes_ref block: (8, TILE_ROWS, 128); each row is a dense (R, 128) plane.
    p_cx, p_cy, p_w, p_h = boxes_ref[0], boxes_ref[1], boxes_ref[2], boxes_ref[3]
    t_cx, t_cy, t_w, t_h = boxes_ref[4], boxes_ref[5], boxes_ref[6], boxes_ref[7]

    half_pw, half_ph = p_w * 0.5, p_h * 0.5
    half_tw, half_th = t_w * 0.5, t_h * 0.5

    p_x1, p_x2 = p_cx - half_pw, p_cx + half_pw
    p_y1, p_y2 = p_cy - half_ph, p_cy + half_ph
    t_x1, t_x2 = t_cx - half_tw, t_cx + half_tw
    t_y1, t_y2 = t_cy - half_th, t_cy + half_th

    tl_x = jnp.maximum(p_x1, t_x1)
    tl_y = jnp.maximum(p_y1, t_y1)
    br_x = jnp.minimum(p_x2, t_x2)
    br_y = jnp.minimum(p_y2, t_y2)

    area_p = p_w * p_h
    area_g = t_w * t_h

    # Single boolean AND + single where (instead of two float wheres + muls).
    en = jnp.logical_and(tl_x < br_x, tl_y < br_y)
    area_i = jnp.where(en, (br_x - tl_x) * (br_y - tl_y), jnp.float32(0.0))
    area_u = area_p + area_g - area_i
    # Exact reciprocal (approx=True would be cheaper but exceeds 1e-5 tolerance).
    iou = area_i * pl.reciprocal(area_u + jnp.float32(1e-16), approx=False)

    if loss_type == "iou":
        loss = jnp.float32(1.0) - iou * iou
    elif loss_type == "giou":
        c_w = jnp.maximum(p_x2, t_x2) - jnp.minimum(p_x1, t_x1)
        c_h = jnp.maximum(p_y2, t_y2) - jnp.minimum(p_y1, t_y1)
        area_c = c_w * c_h
        giou = iou - (area_c - area_u) * pl.reciprocal(
            jnp.maximum(area_c, jnp.float32(1e-16)), approx=False)
        loss = jnp.float32(1.0) - jnp.clip(giou, -1.0, 1.0)
    else:
        raise ValueError(f"unknown loss_type {loss_type}")

    if reduction == "none":
        out_ref[...] = loss                                   # dense (R, 128) vst
        return

    # --- sum / mean: resident (1,1) accumulator across the grid axis. ---
    i = pl.program_id(0)
    is_last = i == pl.num_programs(0) - 1

    @pl.when(i == 0)
    def _init():
        out_ref[...] = jnp.zeros_like(out_ref)

    @pl.when(jnp.logical_not(is_last))
    def _accumulate():
        out_ref[...] += jnp.sum(loss, keepdims=True)

    @pl.when(is_last)
    def _finalize():
        n = n_ref[0]
        r, l = loss.shape
        row = jax.lax.broadcasted_iota(jnp.int32, (r, l), 0)
        lane = jax.lax.broadcasted_iota(jnp.int32, (r, l), 1)
        idx = i * tile_elems + row * _LANES + lane
        masked = jnp.where(idx < n, loss, jnp.float32(0.0))
        total = out_ref[...] + jnp.sum(masked, keepdims=True)
        if reduction == "mean":
            denom = jnp.reshape(n, (1, 1)).astype(jnp.float32)
            total = total / denom
        out_ref[...] = total


def iou_loss(pred, target, reduction="none", loss_type="iou"):
    """JAX/Pallas equivalent of IOUloss.forward (YOLOX)."""
    assert pred.shape[0] == target.shape[0]
    pred = jnp.reshape(pred, (-1, 4)).astype(jnp.float32)
    target = jnp.reshape(target, (-1, 4)).astype(jnp.float32)
    n = pred.shape[0]

    rows_needed = max(1, pl.cdiv(n, _LANES))
    tile_rows = min(_MAX_TILE_ROWS, ((rows_needed + 7) // 8) * 8)
    n_tiles = pl.cdiv(rows_needed, tile_rows)
    total_rows = n_tiles * tile_rows
    npad = total_rows * _LANES
    tile_elems = tile_rows * _LANES

    # Repack (N,4)+(N,4) -> coordinate-planar (8, total_rows, 128).
    # Zero padding is numerically safe (no NaN/Inf) and is sliced/masked away.
    boxes = jnp.concatenate([pred, target], axis=1)           # (N, 8)
    boxes = jnp.pad(boxes, ((0, npad - n), (0, 0)))           # (npad, 8)
    boxes = jnp.transpose(boxes).reshape(8, total_rows, _LANES)

    n_arr = jnp.array([n], dtype=jnp.int32)

    kernel = functools.partial(
        _iou_loss_kernel,
        loss_type=loss_type,
        reduction=reduction,
        tile_elems=tile_elems,
    )

    in_spec = pl.BlockSpec((8, tile_rows, _LANES), lambda i, n_ref: (0, i, 0))

    if reduction == "none":
        out_shape = jax.ShapeDtypeStruct((total_rows, _LANES), jnp.float32)
        out_spec = pl.BlockSpec((tile_rows, _LANES), lambda i, n_ref: (i, 0))
        dim_sem = ("parallel",)
    else:
        out_shape = jax.ShapeDtypeStruct((1, 1), jnp.float32)
        out_spec = pl.BlockSpec((1, 1), lambda i, n_ref: (0, 0))
        dim_sem = ("arbitrary",)

    out = pl.pallas_call(
        kernel,
        out_shape=out_shape,
        grid_spec=pltpu.PrefetchScalarGridSpec(
            num_scalar_prefetch=1,
            grid=(n_tiles,),
            in_specs=[in_spec],
            out_specs=out_spec,
        ),
        compiler_params=pltpu.CompilerParams(dimension_semantics=dim_sem),
    )(n_arr, boxes)

    if reduction == "none":
        return out.reshape(-1)[:n]
    return out[0, 0]


def _reference_iou_loss(pred, target, reduction="none", loss_type="iou"):
    """Pure-JAX reference, mirrors the PyTorch module exactly."""
    pred = jnp.reshape(pred, (-1, 4)).astype(jnp.float32)
    target = jnp.reshape(target, (-1, 4)).astype(jnp.float32)
    tl = jnp.maximum(pred[:, :2] - pred[:, 2:] / 2, target[:, :2] - target[:, 2:] / 2)
    br = jnp.minimum(pred[:, :2] + pred[:, 2:] / 2, target[:, :2] + target[:, 2:] / 2)
    area_p = jnp.prod(pred[:, 2:], axis=1)
    area_g = jnp.prod(target[:, 2:], axis=1)
    en = jnp.prod((tl < br).astype(tl.dtype), axis=1)
    area_i = jnp.prod(br - tl, axis=1) * en
    area_u = area_p + area_g - area_i
    iou = area_i / (area_u + 1e-16)
    if loss_type == "iou":
        loss = 1 - iou ** 2
    elif loss_type == "giou":
        c_tl = jnp.minimum(pred[:, :2] - pred[:, 2:] / 2, target[:, :2] - target[:, 2:] / 2)
        c_br = jnp.maximum(pred[:, :2] + pred[:, 2:] / 2, target[:, :2] + target[:, 2:] / 2)
        area_c = jnp.prod(c_br - c_tl, axis=1)
        giou = iou - (area_c - area_u) / jnp.maximum(area_c, 1e-16)
        loss = 1 - jnp.clip(giou, -1.0, 1.0)
    if reduction == "mean":
        loss = loss.mean()
    elif reduction == "sum":
        loss = loss.sum()
    return loss


if __name__ == "__main__":
    key = jax.random.PRNGKey(0)
    ok = True
    # n=8: single sub-128 tile; n=200: spans >1 lane-row, exercises tail masking.
    for n_boxes in (8, 200):
        k1, k2, k3, k4 = jax.random.split(jax.random.fold_in(key, n_boxes), 4)
        pred = jnp.concatenate(
            [jax.random.uniform(k1, (n_boxes, 2), minval=0.0, maxval=10.0),
             jax.random.uniform(k2, (n_boxes, 2), minval=1.0, maxval=5.0)], axis=1)
        target = jnp.concatenate(
            [jax.random.uniform(k3, (n_boxes, 2), minval=0.0, maxval=10.0),
             jax.random.uniform(k4, (n_boxes, 2), minval=1.0, maxval=5.0)], axis=1)

        for red in ("none", "sum", "mean"):
            for lt in ("iou", "giou"):
                out = jax.block_until_ready(
                    iou_loss(pred, target, reduction=red, loss_type=lt))
                ref = _reference_iou_loss(pred, target, reduction=red, loss_type=lt)
                if not jnp.allclose(out, ref, atol=1e-5, rtol=1e-5):
                    ok = False

    if not ok:
        raise SystemExit("IOUloss Pallas kernel mismatch vs reference")
    print("KERNEL_OK")
</pallas_src>

<mosaic_0001>
module attributes {stable_mosaic.version = 11 : i64} {
  func.func @_iou_loss_kernel(%arg0: i32, %arg1: memref<1xi32, #tpu.memory_space<smem>>, %arg2: memref<8x8x128xf32, #tpu.memory_space<vmem>>, %arg3: memref<8x128xf32, #tpu.memory_space<vmem>>) attributes {dimension_semantics = [#tpu.dimension_semantics<parallel>], iteration_bounds = array<i64: 1>, scalar_prefetch = 1 : i64, scratch_operands = 0 : i64, tpu.core_type = #tpu.core_type<tc>, window_params = [{transform_indices = @transform_0, window_bounds = array<i64: 8, 8, 128>}, {transform_indices = @transform_1, window_bounds = array<i64: 8, 128>}]} {
    %c0 = arith.constant 0 : index
    %c0_0 = arith.constant 0 : index
    %c0_1 = arith.constant 0 : index
    %0 = vector.load %arg2[%c0, %c0_0, %c0_1] : memref<8x8x128xf32, #tpu.memory_space<vmem>>, vector<1x8x128xf32>
    %1 = vector.shape_cast %0 : vector<1x8x128xf32> to vector<8x128xf32>
    %c1 = arith.constant 1 : index
    %c0_2 = arith.constant 0 : index
    %c0_3 = arith.constant 0 : index
    %2 = vector.load %arg2[%c1, %c0_2, %c0_3] : memref<8x8x128xf32, #tpu.memory_space<vmem>>, vector<1x8x128xf32>
    %3 = vector.shape_cast %2 : vector<1x8x128xf32> to vector<8x128xf32>
    %c2 = arith.constant 2 : index
    %c0_4 = arith.constant 0 : index
    %c0_5 = arith.constant 0 : index
    %4 = vector.load %arg2[%c2, %c0_4, %c0_5] : memref<8x8x128xf32, #tpu.memory_space<vmem>>, vector<1x8x128xf32>
    %5 = vector.shape_cast %4 : vector<1x8x128xf32> to vector<8x128xf32>
    %c3 = arith.constant 3 : index
    %c0_6 = arith.constant 0 : index
    %c0_7 = arith.constant 0 : index
    %6 = vector.load %arg2[%c3, %c0_6, %c0_7] : memref<8x8x128xf32, #tpu.memory_space<vmem>>, vector<1x8x128xf32>
    %7 = vector.shape_cast %6 : vector<1x8x128xf32> to vector<8x128xf32>
    %c4 = arith.constant 4 : index
    %c0_8 = arith.constant 0 : index
    %c0_9 = arith.constant 0 : index
    %8 = vector.load %arg2[%c4, %c0_8, %c0_9] : memref<8x8x128xf32, #tpu.memory_space<vmem>>, vector<1x8x128xf32>
    %9 = vector.shape_cast %8 : vector<1x8x128xf32> to vector<8x128xf32>
    %c5 = arith.constant 5 : index
    %c0_10 = arith.constant 0 : index
    %c0_11 = arith.constant 0 : index
    %10 = vector.load %arg2[%c5, %c0_10, %c0_11] : memref<8x8x128xf32, #tpu.memory_space<vmem>>, vector<1x8x128xf32>
    %11 = vector.shape_cast %10 : vector<1x8x128xf32> to vector<8x128xf32>
    %c6 = arith.constant 6 : index
    %c0_12 = arith.constant 0 : index
    %c0_13 = arith.constant 0 : index
    %12 = vector.load %arg2[%c6, %c0_12, %c0_13] : memref<8x8x128xf32, #tpu.memory_space<vmem>>, vector<1x8x128xf32>
    %13 = vector.shape_cast %12 : vector<1x8x128xf32> to vector<8x128xf32>
    %c7 = arith.constant 7 : index
    %c0_14 = arith.constant 0 : index
    %c0_15 = arith.constant 0 : index
    %14 = vector.load %arg2[%c7, %c0_14, %c0_15] : memref<8x8x128xf32, #tpu.memory_space<vmem>>, vector<1x8x128xf32>
    %15 = vector.shape_cast %14 : vector<1x8x128xf32> to vector<8x128xf32>
    %cst = arith.constant 5.000000e-01 : f32
    %16 = vector.broadcast %cst : f32 to vector<8x128xf32>
    %17 = arith.mulf %5, %16 : vector<8x128xf32>
    %cst_16 = arith.constant 5.000000e-01 : f32
    %18 = vector.broadcast %cst_16 : f32 to vector<8x128xf32>
    %19 = arith.mulf %7, %18 : vector<8x128xf32>
    %cst_17 = arith.constant 5.000000e-01 : f32
    %20 = vector.broadcast %cst_17 : f32 to vector<8x128xf32>
    %21 = arith.mulf %13, %20 : vector<8x128xf32>
    %cst_18 = arith.constant 5.000000e-01 : f32
    %22 = vector.broadcast %cst_18 : f32 to vector<8x128xf32>
    %23 = arith.mulf %15, %22 : vector<8x128xf32>
    %24 = arith.subf %1, %17 : vector<8x128xf32>
    %25 = arith.addf %1, %17 : vector<8x128xf32>
    %26 = arith.subf %3, %19 : vector<8x128xf32>
    %27 = arith.addf %3, %19 : vector<8x128xf32>
    %28 = arith.subf %9, %21 : vector<8x128xf32>
    %29 = arith.addf %9, %21 : vector<8x128xf32>
    %30 = arith.subf %11, %23 : vector<8x128xf32>
    %31 = arith.addf %11, %23 : vector<8x128xf32>
    %32 = arith.maximumf %24, %28 : vector<8x128xf32>
    %33 = arith.maximumf %26, %30 : vector<8x128xf32>
    %34 = arith.minimumf %25, %29 : vector<8x128xf32>
    %35 = arith.minimumf %27, %31 : vector<8x128xf32>
    %36 = arith.mulf %5, %7 : vector<8x128xf32>
    %37 = arith.mulf %13, %15 : vector<8x128xf32>
    %38 = arith.cmpf olt, %32, %34 : vector<8x128xf32>
    %39 = arith.cmpf olt, %33, %35 : vector<8x128xf32>
    %40 = arith.andi %38, %39 : vector<8x128xi1>
    %41 = arith.subf %34, %32 : vector<8x128xf32>
    %42 = arith.subf %35, %33 : vector<8x128xf32>
    %43 = arith.mulf %41, %42 : vector<8x128xf32>
    %cst_19 = arith.constant 0.000000e+00 : f32
    %44 = vector.broadcast %cst_19 : f32 to vector<8x128xf32>
    %45 = arith.select %40, %43, %44 : vector<8x128xi1>, vector<8x128xf32>
    %46 = arith.addf %36, %37 : vector<8x128xf32>
    %47 = arith.subf %46, %45 : vector<8x128xf32>
    %cst_20 = arith.constant 1.000000e-16 : f32
    %48 = vector.broadcast %cst_20 : f32 to vector<8x128xf32>
    %49 = arith.addf %47, %48 : vector<8x128xf32>
    %50 = tpu.reciprocal %49 : vector<8x128xf32> -> vector<8x128xf32>
    %51 = arith.mulf %45, %50 : vector<8x128xf32>
    %52 = arith.mulf %51, %51 : vector<8x128xf32>
    %cst_21 = arith.constant 1.000000e+00 : f32
    %53 = vector.broadcast %cst_21 : f32 to vector<8x128xf32>
    %54 = arith.subf %53, %52 : vector<8x128xf32>
    %c0_22 = arith.constant 0 : index
    %c0_23 = arith.constant 0 : index
    %55 = vector.load %arg3[%c0_22, %c0_23] : memref<8x128xf32, #tpu.memory_space<vmem>>, vector<8x128xf32>
    tpu.vector_store %arg3[%c0_22, %c0_23], %54 {strides = array<i32>} : memref<8x128xf32, #tpu.memory_space<vmem>>, vector<8x128xf32>,
    return
  }
  func.func @transform_0(%arg0: i32, %arg1: memref<1xi32, #tpu.memory_space<smem>>) -> (i32, i32, i32) {
    %c0_i32 = arith.constant 0 : i32
    %c0_i32_0 = arith.constant 0 : i32
    %c0_i32_1 = arith.constant 0 : i32
    return %c0_i32, %arg0, %c0_i32_0 : i32, i32, i32
  }
  func.func @transform_1(%arg0: i32, %arg1: memref<1xi32, #tpu.memory_space<smem>>) -> (i32, i32) {
    %c0_i32 = arith.constant 0 : i32
    %c0_i32_0 = arith.constant 0 : i32
    return %arg0, %c0_i32 : i32, i32
  }
}

</mosaic_0001>

<llo_original>
// kernel: tpu_custom_call.1
$region0: #{tpu_custom_call.1}
  #allocation0 [shape = 'u32[]', space=smem, size = 0x4, offset = 0x4, fixed_abs, tag = 'smem constant byte address 0x4 - core index']
  #allocation1 [shape = 'u32[144,128]{1,0:T(1,128)}', space=vmem, size = 0x12000, scoped, tag = 'internal scratch']
  #allocation2 [shape = 's32[1]{0}', space=sflag, size = 0x4, scoped, tag = 'scoped memory for tpu_custom_call.1']
  #allocation3 [shape = 's32[1]{0:T(128)S(6)}', space=smem, size = 0x200, scoped, tag = 'prefetched SMEM operand 0']
  %s0 = inlined_call_operand.<no memory space> [shape: s32[1], index: 0, kind: input, shape index: {}]
  %s1 = inlined_call_operand.hbm [shape: f32[8,8,128], index: 1, kind: input, shape index: {}]
  %s2 = inlined_call_operand.hbm [shape: f32[8,128], index: 2, kind: output, shape index: {}]
  %s3 = sld [smem:[#allocation0]]
  $region18: #{tpu_custom_call.1} parent=0
    _
  %s5 = ssub.s32 1, %s3
  %s6 = scalar_select 0, %s5, %s3
  %7 = sst [smem:[#allocation3]] %s0
  $region1: #{tpu_custom_call.1} parent=0
    #allocation4 [shape = 'u8[32768]{0}', space=vmem, size = 0x8000, scoped, tag = 'input window, operand 1, single buffered']
    #allocation5 [shape = 's32[1]{0}', space=sflag, size = 0x4, scoped, tag = 'scoped memory for tpu_custom_call.1']
    #allocation6 [shape = 's32[1]{0}', space=sflag, size = 0x4, scoped, tag = 'scoped memory for tpu_custom_call.1']
    #allocation7 [shape = 'u8[4096]{0}', space=vmem, size = 0x1000, scoped, tag = 'output window, operand 0, single buffered']
    %8 = vsyncpa [#allocation5], 0
    %9 = vsyncpa [#allocation6], 0
    // Predicated region
    $region2: #{tpu_custom_call.1} parent=1 // pred_check
      _
    $region3: #{tpu_custom_call.1} parent=1 // pred_check_branch
      %11 = sbr.rel (0) target = $region5
    $region4: #{tpu_custom_call.1} parent=1 // pred_region
      %s13 = ssub.s32 1024, 1024
      %14 = vsyncadd [#allocation5], %s13
      %s15 = sshll.u32 [#allocation4], 4
      %s16 = int_to_ptr.vmem [resolvable:$true] %s15
      %21 = dma.hbm_to_vmem [thread:$0]  %s1, 1024, %s16, [#allocation5], 128, 128, 8
    $region5: #{tpu_custom_call.1} parent=1 // pred_fallthru
      _
    // Predicated region
    $region6: #{tpu_custom_call.1} parent=1 // pred_check
      _
    $region7: #{tpu_custom_call.1} parent=1 // pred_check_branch
      %23 = sbr.rel (0) target = $region9
    $region8: #{tpu_custom_call.1} parent=1 // pred_region
      %24 = dma.done [#allocation5], 1024
    $region9: #{tpu_custom_call.1} parent=1 // pred_fallthru
      _
    %v25 = vld [vmem:[#allocation4] sm:$0xff]
    %s26 = scalar_lea.vmem [#allocation4], 8
    %v27 = vld [vmem:[%s26] sm:$0xff]
    %s28 = scalar_lea.vmem [#allocation4], 16
    %v29 = vld [vmem:[%s28] sm:$0xff]
    %s30 = scalar_lea.vmem [#allocation4], 24
    %v31 = vld [vmem:[%s30] sm:$0xff]
    %s32 = scalar_lea.vmem [#allocation4], 32
    %v33 = vld [vmem:[%s32] sm:$0xff]
    %s34 = scalar_lea.vmem [#allocation4], 40
    %v35 = vld [vmem:[%s34] sm:$0xff]
    %s36 = scalar_lea.vmem [#allocation4], 48
    %v37 = vld [vmem:[%s36] sm:$0xff]
    %s38 = scalar_lea.vmem [#allocation4], 56
    %v39 = vld [vmem:[%s38] sm:$0xff]
    %v40 = vmul.f32 %v29, 0.5
    %v41 = vmul.f32 %v31, 0.5
    %v42 = vmul.f32 %v37, 0.5
    %v43 = vmul.f32 %v39, 0.5
    %v44 = vsub.f32 %v25, %v40
    %v45 = vadd.f32 %v25, %v40
    %v46 = vsub.f32 %v27, %v41
    %v47 = vadd.f32 %v27, %v41
    %v48 = vsub.f32 %v33, %v42
    %v49 = vadd.f32 %v33, %v42
    %v50 = vsub.f32 %v35, %v43
    %v51 = vadd.f32 %v35, %v43
    %v52 = vmax.f32 %v44, %v48
    %v53 = vmax.f32 %v46, %v50
    %v54 = vmin.f32 %v45, %v49
    %v55 = vmin.f32 %v47, %v51
    %v56 = vmul.f32 %v29, %v31
    %v57 = vmul.f32 %v37, %v39
    %vm58 = vcmp.lt.f32.partialorder %v52, %v54
    %vm59 = vcmp.lt.f32.partialorder %v53, %v55
    %vm60 = vmand %vm58, %vm59
    %v61 = vsub.f32 %v54, %v52
    %v62 = vsub.f32 %v55, %v53
    %v63 = vmul.f32 %v61, %v62
    %v64 = vsel %vm60, %v63, 0.0
    %v65 = vadd.f32 %v56, %v57
    %v66 = vsub.f32 %v65, %v64
    %v67 = vadd.f32 %v66, 1e-16
    %v68 = vrcp.pop %v67
    %v69 = vmul.f32 %v64, %v68
    %v70 = vmul.f32 %v69, %v69
    %v71 = vsub.f32 1.0, %v70
    %72 = vst [vmem:[#allocation7] sm:$0xff] %v71
    // Predicated region
    $region10: #{tpu_custom_call.1} parent=1 // pred_check
      _
    $region11: #{tpu_custom_call.1} parent=1 // pred_check_branch
      %74 = sbr.rel (0) target = $region13
    $region12: #{tpu_custom_call.1} parent=1 // pred_region
      %s76 = ssub.s32 128, 128
      %77 = vsyncadd [#allocation6], %s76
      %s79 = sshll.u32 [#allocation7], 4
      %s80 = int_to_ptr.vmem [resolvable:$true] %s79
      %82 = dma.vmem_to_hbm [thread:$0]  %s80, 128, %s2, [#allocation6]
    $region13: #{tpu_custom_call.1} parent=1 // pred_fallthru
      _
    // Predicated region
    $region14: #{tpu_custom_call.1} parent=1 // pred_check
      _
    $region15: #{tpu_custom_call.1} parent=1 // pred_check_branch
      %84 = sbr.rel (0) target = $region17
    $region16: #{tpu_custom_call.1} parent=1 // pred_region
      %85 = dma.done [#allocation6], 128
    $region17: #{tpu_custom_call.1} parent=1 // pred_fallthru
      _
    %86 = vsyncpa [#allocation5], 1
    %87 = vsyncpa [#allocation6], 1

</llo_original>
